<compile_context>
chip_gen: v6e
topology: v6e:2x2x1
jax: 0.10.0
libtpu: 0.0.40
codegen_flags: <defaults>
</compile_context>

<pallas_src>
import jax
import jax.numpy as jnp
from jax.experimental import pallas as pl
from jax.experimental.pallas import tpu as pltpu


def mlp_softmax_kernel(x_ref, w_ref, b_ref, o_ref):
    # x_ref: (TM, F2)   w_ref: (5, F2)   b_ref: (5, 1)   o_ref: (5, TM)  (lane-dense)
    x = x_ref[...]
    w = w_ref[...]
    b = b_ref[...]

    # logits_t[n, m] = sum_k w[n, k] * x[m, k]  ->  (5, TM), f32 accumulation.
    # Contracting both operands on their last axis avoids any explicit transpose.
    logits = jax.lax.dot_general(
        w, x, (((1,), (1,)), ((), ())),
        preferred_element_type=jnp.float32,
    ) + b

    # Numerically-stable softmax over the class axis (axis 0 here == PyTorch dim=1).
    # Note: for a partial last tile, padded batch columns hold unspecified data; the
    # softmax is column-local, so any garbage stays in columns whose writeback is
    # discarded by Pallas.
    m = jnp.max(logits, axis=0, keepdims=True)
    e = jnp.exp(logits - m)
    denom = jnp.sum(e, axis=0, keepdims=True)
    o_ref[...] = (e / denom).astype(o_ref.dtype)


def _round_up(v, m):
    return ((v + m - 1) // m) * m


def mlp_forward(x, weight, bias, *, max_block_rows=8192,
                vmem_budget_bytes=12 * 1024 * 1024):
    """x: (B, 2*input_size) f32; weight: (5, 2*input_size) f32; bias: (5,) f32.

    Returns softmax(x @ weight.T + bias, axis=1), shape (B, 5), f32.
    """
    B, F2 = x.shape
    out_features = weight.shape[0]
    b_col = bias.reshape(out_features, 1)   # keep refs >= 2D for TPU layout

    LANE, SUBLANE = 128, 8

    # Padded, double-buffered VMEM bytes per batch row:
    #   x tile row:   F2 pads to 128 lanes  -> 4 * round_up(F2, 128) bytes
    #   out tile col: 5 pads to 8 sublanes  -> 4 * round_up(5, 8)    bytes
    per_row_bytes = 2 * 4 * (_round_up(F2, LANE) + _round_up(out_features, SUBLANE))

    if B <= LANE:
        # Single tile; block dims equal full array dims, so no (8,128) constraint.
        tm = B
    else:
        tm = vmem_budget_bytes // per_row_bytes          # fit the VMEM budget
        tm = min(tm, max_block_rows)                     # review: 4K-8K is the sweet spot
        tm = min(tm, _round_up(pl.cdiv(B, 2), LANE))     # keep >= 2 grid steps (v7x dual-TC)
        tm = max(LANE, (tm // LANE) * LANE)              # lane-dense out block: multiple of 128
    grid = (pl.cdiv(B, tm),)

    cost = pl.CostEstimate(
        flops=2 * B * F2 * out_features,
        transcendentals=B * out_features,
        bytes_accessed=4 * (B * F2 + F2 * out_features + out_features
                            + B * out_features),
    )

    out_t = pl.pallas_call(
        mlp_softmax_kernel,
        out_shape=jax.ShapeDtypeStruct((out_features, B), jnp.float32),
        grid=grid,
        in_specs=[
            pl.BlockSpec((tm, F2), lambda i: (i, 0)),                 # streamed x tile
            pl.BlockSpec((out_features, F2), lambda i: (0, 0)),       # resident weight
            pl.BlockSpec((out_features, 1), lambda i: (0, 0)),        # resident bias
        ],
        out_specs=pl.BlockSpec((out_features, tm), lambda i: (0, i)),  # lane-dense (5, tm)
        compiler_params=pltpu.CompilerParams(
            dimension_semantics=("parallel",),   # megacore / v7x dual-TC sharding
        ),
        cost_estimate=cost,
    )(x, weight, b_col)

    # Tiny (5, B) -> (B, 5) transpose in plain JAX to restore the PyTorch layout.
    return out_t.T


if __name__ == "__main__":
    # Small, module-consistent shapes: input_size=16 -> features = 2*16 = 32.
    # batch=256 keeps the data tiny but exercises the batch grid (2 tiles of 128
    # rows) and the "parallel" axis.
    input_size = 16
    in_features = 2 * input_size
    out_features = 5
    batch = 256

    key = jax.random.PRNGKey(0)
    kx, kw, kb = jax.random.split(key, 3)

    # Deterministic parameter init mimicking torch.nn.Linear default:
    # U(-1/sqrt(fan_in), 1/sqrt(fan_in))
    bound = 1.0 / (in_features ** 0.5)
    weight = jax.random.uniform(
        kw, (out_features, in_features), jnp.float32, minval=-bound, maxval=bound
    )
    bias = jax.random.uniform(
        kb, (out_features,), jnp.float32, minval=-bound, maxval=bound
    )

    x = jax.random.normal(kx, (batch, in_features), jnp.float32)

    out = mlp_forward(x, weight, bias)
    out = jax.block_until_ready(out)

    # Plain-JAX reference.  Exact division in the kernel lets the tolerance tighten
    # vs. the previous approx-reciprocal version; remaining slack covers MXU
    # multi-pass f32 matmul vs. the XLA reference dot.
    ref = jax.nn.softmax(x @ weight.T + bias, axis=1)
    assert out.shape == (batch, out_features)
    max_err = float(jnp.max(jnp.abs(out - ref)))
    assert jnp.allclose(out, ref, atol=1e-3, rtol=1e-3), max_err

    print("KERNEL_OK")
</pallas_src>

<mosaic_0001>
module attributes {stable_mosaic.version = 11 : i64} {
  func.func @mlp_softmax_kernel(%arg0: i32, %arg1: memref<128x32xf32, #tpu.memory_space<vmem>>, %arg2: memref<5x32xf32, #tpu.memory_space<vmem>>, %arg3: memref<5x1xf32, #tpu.memory_space<vmem>>, %arg4: memref<5x128xf32, #tpu.memory_space<vmem>>) attributes {dimension_semantics = [#tpu.dimension_semantics<parallel>], iteration_bounds = array<i64: 2>, scalar_prefetch = 0 : i64, scratch_operands = 0 : i64, tpu.core_type = #tpu.core_type<tc>, window_params = [{transform_indices = @transform_0, window_bounds = array<i64: 128, 32>}, {pipeline_mode = #tpu.pipeline_mode<synchronous>, transform_indices = @transform_1, window_bounds = array<i64: 5, 32>}, {pipeline_mode = #tpu.pipeline_mode<synchronous>, transform_indices = @transform_2, window_bounds = array<i64: 5, 1>}, {transform_indices = @transform_3, window_bounds = array<i64: 5, 128>}]} {
    %c0 = arith.constant 0 : index
    %c0_0 = arith.constant 0 : index
    %0 = vector.load %arg1[%c0, %c0_0] : memref<128x32xf32, #tpu.memory_space<vmem>>, vector<128x32xf32>
    %c0_1 = arith.constant 0 : index
    %c0_2 = arith.constant 0 : index
    %1 = vector.load %arg2[%c0_1, %c0_2] : memref<5x32xf32, #tpu.memory_space<vmem>>, vector<5x32xf32>
    %c0_3 = arith.constant 0 : index
    %c0_4 = arith.constant 0 : index
    %2 = vector.load %arg3[%c0_3, %c0_4] : memref<5x1xf32, #tpu.memory_space<vmem>>, vector<5x1xf32>
    %cst = arith.constant dense<0.000000e+00> : vector<5x128xf32>
    %3 = tpu.matmul %1, %0, %cst {dimension_numbers = #tpu.dot_dimension_numbers<[1], [1], [0], [0], [0, 0, 1, 0], [], []>} : vector<5x32xf32>, vector<128x32xf32>, vector<5x128xf32> -> vector<5x128xf32>
    %4 = vector.broadcast %2 : vector<5x1xf32> to vector<5x128xf32>
    %5 = arith.addf %3, %4 : vector<5x128xf32>
    %cst_5 = arith.constant dense<0xFF800000> : vector<128xf32>
    %6 = vector.multi_reduction <maximumf>, %5, %cst_5 [0] : vector<5x128xf32> to vector<128xf32>
    %7 = vector.shape_cast %6 : vector<128xf32> to vector<1x128xf32>
    %8 = vector.broadcast %7 : vector<1x128xf32> to vector<5x128xf32>
    %9 = arith.subf %5, %8 : vector<5x128xf32>
    %10 = math.exp %9 : vector<5x128xf32>
    %cst_6 = arith.constant dense<0.000000e+00> : vector<128xf32>
    %11 = vector.multi_reduction <add>, %10, %cst_6 [0] : vector<5x128xf32> to vector<128xf32>
    %12 = vector.shape_cast %11 : vector<128xf32> to vector<1x128xf32>
    %13 = vector.broadcast %12 : vector<1x128xf32> to vector<5x128xf32>
    %14 = arith.divf %10, %13 : vector<5x128xf32>
    %c0_7 = arith.constant 0 : index
    %c0_8 = arith.constant 0 : index
    %15 = vector.load %arg4[%c0_7, %c0_8] : memref<5x128xf32, #tpu.memory_space<vmem>>, vector<5x128xf32>
    tpu.vector_store %arg4[%c0_7, %c0_8], %14 {strides = array<i32>} : memref<5x128xf32, #tpu.memory_space<vmem>>, vector<5x128xf32>,
    return
  }
  func.func @transform_0(%arg0: i32) -> (i32, i32) {
    %c0_i32 = arith.constant 0 : i32
    %c0_i32_0 = arith.constant 0 : i32
    return %arg0, %c0_i32 : i32, i32
  }
  func.func @transform_1(%arg0: i32) -> (i32, i32) {
    %c0_i32 = arith.constant 0 : i32
    %c0_i32_0 = arith.constant 0 : i32
    %c0_i32_1 = arith.constant 0 : i32
    return %c0_i32, %c0_i32_0 : i32, i32
  }
  func.func @transform_2(%arg0: i32) -> (i32, i32) {
    %c0_i32 = arith.constant 0 : i32
    %c0_i32_0 = arith.constant 0 : i32
    %c0_i32_1 = arith.constant 0 : i32
    return %c0_i32, %c0_i32_0 : i32, i32
  }
  func.func @transform_3(%arg0: i32) -> (i32, i32) {
    %c0_i32 = arith.constant 0 : i32
    %c0_i32_0 = arith.constant 0 : i32
    return %c0_i32, %arg0 : i32, i32
  }
}

</mosaic_0001>

<llo_original>
// kernel: tpu_custom_call.1
$region0: #{tpu_custom_call.1}
  #allocation0 [shape = 'u32[]', space=smem, size = 0x4, offset = 0x4, fixed_abs, tag = 'smem constant byte address 0x4 - core index']
  #allocation1 [shape = 'u32[144,128]{1,0:T(1,128)}', space=vmem, size = 0x12000, scoped, tag = 'internal scratch']
  %s0 = inlined_call_operand.vmem [shape: f32[256,32], index: 0, kind: input, shape index: {}]
  %s1 = inlined_call_operand.vmem [shape: f32[5,32], index: 1, kind: input, shape index: {}]
  %s2 = inlined_call_operand.vmem [shape: f32[5,1], index: 2, kind: input, shape index: {}]
  %s3 = inlined_call_operand.hbm [shape: f32[5,256], index: 3, kind: output, shape index: {}]
  %s4 = sld [smem:[#allocation0]]
  $region45: #{tpu_custom_call.1} parent=0
    _
  %s6 = ssub.s32 1, %s4
  %s7 = scalar_select 0, %s6, %s4
  $region1: #{tpu_custom_call.1} parent=0
    #allocation2 [shape = 'u8[8192]{0}', space=vmem, size = 0x2000, scoped, tag = 'output window, operand 0']
    #allocation3 [shape = 's32[2]{0}', space=sflag, size = 0x8, scoped, tag = 'scoped memory for tpu_custom_call.1']
    %8 = vsyncpa [#allocation3], 0
    %s9 = scalar_lea.sflag [#allocation3], 1
    %10 = vsyncpa %s9, 0
    loop: start=0, step=1, limit=4
    $region2: #{tpu_custom_call.1} parent=1 // loop_pre_header
      _
    $region3: #{tpu_custom_call.1} parent=1 // loop_header
      %s12 = sphi 0, %s16
      %p13 = scmp.ge.s32.totalorder %s12, 4
      %s22 = sphi 0, %s24
      %s25 = sphi 0, %s22
      %s26 = sphi 0, %s25
      %s42 = sphi 0, %s26
      %s46 = sphi 0, %s46
      %s48 = sphi 0, %s46
      %s49 = sphi 0, %s48
      %s63 = sphi 0, %s49
      %s67 = sphi 0, %s67
      %s69 = sphi 0, %s67
      %s70 = sphi 0, %s69
      %s84 = sphi 0, %s70
      %s90 = sphi 0, %s92
      %s93 = sphi 0, %s90
      %s94 = sphi 0, %s93
      %s110 = sphi 0, %s94
    $region4: #{tpu_custom_call.1} parent=1 // loop_header_branch
      %15 = sbr.rel (%p13) target = $region8
    $region5: #{tpu_custom_call.1} parent=1 // loop_body
      %s17 = ssub.s32 %s12, 1
      %s18 = ssub.s32 %s12, 2
      %s19 = sadd.s32 %s12, 1
      %s20 = ssub.s32 %s12, %s19
      %p21 = scmp.eq.s32.totalorder %s20, 0
      %s23 = sadd.s32 %s22, 1
      %s24 = scalar_select %p21, %s22, %s23
      %p27 = pneg %p21
      %p28 = scmp.eq.s32.totalorder %s12, 1
      %p29 = por %p27, %p28
      %p30 = scmp.ne.s32.totalorder %s22, %s25
      %p31 = scmp.eq.s32.totalorder %s12, 0
      %p32 = por %p30, %p31
      %p33 = scmp.ne.s32.totalorder %s22, %s25
      %p34 = scmp.eq.s32.totalorder %s17, 1
      %p35 = por %p33, %p34
      %p36 = scmp.ne.s32.totalorder %s25, %s26
      %p37 = scmp.eq.s32.totalorder %s17, 0
      %p38 = por %p36, %p37
      %p39 = scmp.ne.s32.totalorder %s25, %s26
      %p40 = scmp.eq.s32.totalorder %s18, 1
      %p41 = por %p39, %p40
      %p43 = scmp.ne.s32.totalorder %s26, %s42
      %p44 = scmp.eq.s32.totalorder %s18, 0
      %p45 = por %p43, %p44
      %s47 = sadd.s32 %s46, 1
      %p50 = scmp.eq.s32.totalorder %s12, 1
      %p51 = scmp.ne.s32.totalorder %s46, %s48
      %p52 = scmp.eq.s32.totalorder %s12, 0
      %p53 = por %p51, %p52
      %p54 = scmp.ne.s32.totalorder %s46, %s48
      %p55 = scmp.eq.s32.totalorder %s17, 1
      %p56 = por %p54, %p55
      %p57 = scmp.ne.s32.totalorder %s48, %s49
      %p58 = scmp.eq.s32.totalorder %s17, 0
      %p59 = por %p57, %p58
      %p60 = scmp.ne.s32.totalorder %s48, %s49
      %p61 = scmp.eq.s32.totalorder %s18, 1
      %p62 = por %p60, %p61
      %p64 = scmp.ne.s32.totalorder %s49, %s63
      %p65 = scmp.eq.s32.totalorder %s18, 0
      %p66 = por %p64, %p65
      %s68 = sadd.s32 %s67, 1
      %p71 = scmp.eq.s32.totalorder %s12, 1
      %p72 = scmp.ne.s32.totalorder %s67, %s69
      %p73 = scmp.eq.s32.totalorder %s12, 0
      %p74 = por %p72, %p73
      %p75 = scmp.ne.s32.totalorder %s67, %s69
      %p76 = scmp.eq.s32.totalorder %s17, 1
      %p77 = por %p75, %p76
      %p78 = scmp.ne.s32.totalorder %s69, %s70
      %p79 = scmp.eq.s32.totalorder %s17, 0
      %p80 = por %p78, %p79
      %p81 = scmp.ne.s32.totalorder %s69, %s70
      %p82 = scmp.eq.s32.totalorder %s18, 1
      %p83 = por %p81, %p82
      %p85 = scmp.ne.s32.totalorder %s70, %s84
      %p86 = scmp.eq.s32.totalorder %s18, 0
      %p87 = por %p85, %p86
      %s88 = ssub.s32 %s12, %s19
      %p89 = scmp.eq.s32.totalorder %s88, 0
      %s91 = sadd.s32 %s90, 1
      %s92 = scalar_select %p89, %s90, %s91
      %p95 = pneg %p89
      %p96 = scmp.eq.s32.totalorder %s12, 1
      %p97 = por %p95, %p96
      %p98 = scmp.ne.s32.totalorder %s90, %s93
      %p99 = scmp.eq.s32.totalorder %s12, 0
      %p100 = por %p98, %p99
      %p101 = scmp.ne.s32.totalorder %s90, %s93
      %p102 = scmp.eq.s32.totalorder %s17, 1
      %p103 = por %p101, %p102
      %p104 = scmp.ne.s32.totalorder %s93, %s94
      %p105 = scmp.eq.s32.totalorder %s17, 0
      %p106 = por %p104, %p105
      %p107 = scmp.ne.s32.totalorder %s93, %s94
      %p108 = scmp.eq.s32.totalorder %s18, 1
      %p109 = por %p107, %p108
      %p111 = scmp.ne.s32.totalorder %s94, %s110
      %p112 = scmp.eq.s32.totalorder %s18, 0
      %p113 = por %p111, %p112
      %p114 = scmp.le.s32.totalorder 1, %s12
      %p115 = scmp.lt.s32.totalorder %s12, 3
      %p116 = pnand %p114, %p115
      %p117 = pneg %p116
      // Predicated region
      $region9: #{tpu_custom_call.1} parent=5 // pred_check
        _
      $region10: #{tpu_custom_call.1} parent=5 // pred_check_branch
        %119 = sbr.rel (%p116) target = $region12
      $region11: #{tpu_custom_call.1} parent=5 // pred_region
        %s120 = ssub.s32 %s12, 1
        // Predicated region
        $region13: #{tpu_custom_call.1} parent=11 // pred_check
          %p121 = pneg %p59
        $region14: #{tpu_custom_call.1} parent=11 // pred_check_branch
          %123 = sbr.rel (%p121) target = $region16
        $region15: #{tpu_custom_call.1} parent=11 // pred_region
          _
        $region16: #{tpu_custom_call.1} parent=11 // pred_fallthru
          _
        // Predicated region
        $region17: #{tpu_custom_call.1} parent=11 // pred_check
          %p124 = pneg %p80
        $region18: #{tpu_custom_call.1} parent=11 // pred_check_branch
          %126 = sbr.rel (%p124) target = $region20
        $region19: #{tpu_custom_call.1} parent=11 // pred_region
          _
        $region20: #{tpu_custom_call.1} parent=11 // pred_fallthru
          _
      $region12: #{tpu_custom_call.1} parent=5 // pred_fallthru
        _
      %p127 = scmp.lt.s32.totalorder %s12, 2
      // Predicated region
      $region21: #{tpu_custom_call.1} parent=5 // pred_check
        %p128 = pneg %p127
      $region22: #{tpu_custom_call.1} parent=5 // pred_check_branch
        %130 = sbr.rel (%p128) target = $region24
      $region23: #{tpu_custom_call.1} parent=5 // pred_region
        // Predicated region
        $region25: #{tpu_custom_call.1} parent=23 // pred_check
          %p131 = pneg %p32
        $region26: #{tpu_custom_call.1} parent=23 // pred_check_branch
          %133 = sbr.rel (%p131) target = $region28
        $region27: #{tpu_custom_call.1} parent=23 // pred_region
          %s134 = smul.u32 16, %s12
          %p135 = scmp.lt.s32.totalorder %s134, 31
          %s136 = scalar_select %p135, %s134, 31
          %s137 = smul.addr %s136, 8
          %s138 = scalar_lea.vmem %s0, %s137
          %s139 = smul.u32 16, %s12
        $region28: #{tpu_custom_call.1} parent=23 // pred_fallthru
          _
      $region24: #{tpu_custom_call.1} parent=5 // pred_fallthru
        _
      %p140 = scmp.le.s32.totalorder 1, %s12
      %p141 = scmp.lt.s32.totalorder %s12, 3
      %p142 = pnand %p140, %p141
      %p143 = pneg %p142
      // Predicated region
      $region29: #{tpu_custom_call.1} parent=5 // pred_check
        _
      $region30: #{tpu_custom_call.1} parent=5 // pred_check_branch
        %145 = sbr.rel (%p142) target = $region32
      $region31: #{tpu_custom_call.1} parent=5 // pred_region
        %s146 = ssub.s32 %s12, 1
        %s147 = smul.u32 16, %s17
        %p148 = scmp.lt.s32.totalorder %s147, 31
        %s149 = scalar_select %p148, %s147, 31
        %s150 = smul.addr %s149, 8
        %s151 = scalar_lea.vmem %s0, %s150
        %p152 = pneg %p38
        %p153 = pneg %p35
        %p154 = pneg %p59
        %p155 = pneg %p56
        %p156 = pneg %p80
        %p157 = pneg %p77
        %p158 = pneg %p106
        %p159 = pneg %p103
        %s160 = sand.u32 %s93, 1
        %s161 = scalar_lea.sflag [#allocation3], %s160
        %s162 = sand.u32 %s93, 1
        %s163 = smul.addr %s162, 8
        %s164 = scalar_lea.vmem [#allocation2], %s163
        %s165 = smul.u32 16, %s17
        %p166 = scmp.lt.s32.totalorder %s165, 31
        %s167 = scalar_select %p166, %s165, 31
        %s168 = smul.addr %s167, 8
        %s169 = scalar_lea.vmem %s0, %s168
        %s170 = smul.u32 16, %s17
        %v171 = vld [vmem:[%s169] sm:$0xff]
        %v172 = vld [vmem:[%s169 + $0x8] sm:$0xff]
        %v173 = vld [vmem:[%s169 + $0x10] sm:$0xff]
        %v174 = vld [vmem:[%s169 + $0x18] sm:$0xff]
        %v175 = vld [vmem:[%s169 + $0x20] sm:$0xff]
        %v176 = vld [vmem:[%s169 + $0x28] sm:$0xff]
        %v177 = vld [vmem:[%s169 + $0x30] sm:$0xff]
        %v178 = vld [vmem:[%s169 + $0x38] sm:$0xff]
        %v179 = vld [vmem:[%s169 + $0x40] sm:$0xff]
        %v180 = vld [vmem:[%s169 + $0x48] sm:$0xff]
        %v181 = vld [vmem:[%s169 + $0x50] sm:$0xff]
        %v182 = vld [vmem:[%s169 + $0x58] sm:$0xff]
        %v183 = vld [vmem:[%s169 + $0x60] sm:$0xff]
        %v184 = vld [vmem:[%s169 + $0x68] sm:$0xff]
        %v185 = vld [vmem:[%s169 + $0x70] sm:$0xff]
        %v186 = vld [vmem:[%s169 + $0x78] sm:$0xff]
        %v187 = vld [vmem:[%s1] sm:$0x1f]
        %v188 = vld [vmem:[%s2] sm:$0x1f]
        %190 = vset.pattern.permute.xlu0 0
        %191 = vperm.xlu0 %190, %v188
        %v192 = vpop.permute.xlu0 %191
        %vm194 = vcmask 261120
        %v196 = vsel %vm194, %v187, 0
        %v199 = vsel %vm194, %v171, 0
        %v202 = vsel %vm194, %v172, 0
        %v205 = vsel %vm194, %v173, 0
        %v208 = vsel %vm194, %v174, 0
        %v211 = vsel %vm194, %v175, 0
        %v214 = vsel %vm194, %v176, 0
        %v217 = vsel %vm194, %v177, 0
        %v220 = vsel %vm194, %v178, 0
        %v223 = vsel %vm194, %v179, 0
        %v226 = vsel %vm194, %v180, 0
        %v229 = vsel %vm194, %v181, 0
        %v232 = vsel %vm194, %v182, 0
        %v235 = vsel %vm194, %v183, 0
        %v238 = vsel %vm194, %v184, 0
        %v241 = vsel %vm194, %v185, 0
        %v244 = vsel %vm194, %v186, 0
        %246 = vmatprep.subr.mxu0 0.0
        %247 = vmatpush1.xpose.msra.mxu0 %v244
        %248 = vmatprep.subr.mxu0 0.0
        %249 = vmatpush1.xpose.msra.mxu0 %v241
        %250 = vmatprep.subr.mxu0 0.0
        %251 = vmatpush1.xpose.msra.mxu0 %v238
        %252 = vmatprep.subr.mxu0 0.0
        %253 = vmatpush1.xpose.msra.mxu0 %v235
        %254 = vmatprep.subr.mxu0 0.0
        %255 = vmatpush1.xpose.msra.mxu0 %v232
        %256 = vmatprep.subr.mxu0 0.0
        %257 = vmatpush1.xpose.msra.mxu0 %v229
        %258 = vmatprep.subr.mxu0 0.0
        %259 = vmatpush1.xpose.msra.mxu0 %v226
        %260 = vmatprep.subr.mxu0 0.0
        %261 = vmatpush1.xpose.msra.mxu0 %v223
        %262 = vmatprep.subr.mxu0 0.0
        %263 = vmatpush1.xpose.msra.mxu0 %v220
        %264 = vmatprep.subr.mxu0 0.0
        %265 = vmatpush1.xpose.msra.mxu0 %v217
        %266 = vmatprep.subr.mxu0 0.0
        %267 = vmatpush1.xpose.msra.mxu0 %v214
        %268 = vmatprep.subr.mxu0 0.0
        %269 = vmatpush1.xpose.msra.mxu0 %v211
        %270 = vmatprep.subr.mxu0 0.0
        %271 = vmatpush1.xpose.msra.mxu0 %v208
        %272 = vmatprep.subr.mxu0 0.0
        %273 = vmatpush1.xpose.msra.mxu0 %v205
        %274 = vmatprep.subr.mxu0 0.0
        %275 = vmatpush1.xpose.msra.mxu0 %v202
        %276 = vmatprep.subr.mxu0 0.0
        %277 = vmatpush1.xpose.msra.mxu0 %v199
        %278 = vmatprep.subr.mxu0 0.0
        %279 = vmatpush2.xpose.msra.mxu0 0.0
        %280 = vmatprep.subr.mxu0 0.0
        %281 = vmatpush2.xpose.msra.mxu0 0.0
        %282 = vmatprep.subr.mxu0 0.0
        %283 = vmatpush2.xpose.msra.mxu0 0.0
        %284 = vmatprep.subr.mxu0 0.0
        %285 = vmatpush2.xpose.msra.mxu0 0.0
        %286 = vmatprep.subr.mxu0 0.0
        %287 = vmatpush2.xpose.msra.mxu0 0.0
        %288 = vmatprep.subr.mxu0 0.0
        %289 = vmatpush2.xpose.msra.mxu0 0.0
        %290 = vmatprep.subr.mxu0 0.0
        %291 = vmatpush2.xpose.msra.mxu0 0.0
        %292 = vmatprep.subr.mxu0 0.0
        %293 = vmatpush2.xpose.msra.mxu0 0.0
        %294 = vmatprep.subr.mxu0 0.0
        %295 = vmatpush2.xpose.msra.mxu0 0.0
        %296 = vmatprep.subr.mxu0 0.0
        %297 = vmatpush2.xpose.msra.mxu0 0.0
        %298 = vmatprep.subr.mxu0 0.0
        %299 = vmatpush2.xpose.msra.mxu0 0.0
        %300 = vmatprep.subr.mxu0 0.0
        %301 = vmatpush2.xpose.msra.mxu0 0.0
        %302 = vmatprep.subr.mxu0 0.0
        %303 = vmatpush2.xpose.msra.mxu0 0.0
        %304 = vmatprep.subr.mxu0 0.0
        %305 = vmatpush2.xpose.msra.mxu0 0.0
        %306 = vmatprep.subr.mxu0 0.0
        %307 = vmatpush2.xpose.msra.mxu0 0.0
        %308 = vmatprep.subr.mxu0 0.0
        %309 = vmatpush2.xpose.msra.mxu0 0.0
        %310 = vmatprep.mubr.f32.mxu0 0.0
        %311 = vmatmul.mubr.f32.gmra.mxu0 %v196
        %v312 = vpop.f32.mrf.mxu0
        %v313 = vadd.f32 %v192, %v312
        %v314 = vpop.f32.mrf.mxu0
        %315 = vdwg.mxu0
        %vm316 = vcmask 1044480
        %v317 = vsel %vm316, %v313, -inf
        %v318 = vrot.slane %v317, 4
        %v319 = vmax.f32 %v317, %v318
        %v320 = vrot.slane %v319, 2
        %v321 = vmax.f32 %v319, %v320
        %v322 = vrot.slane %v321, 1
        %v323 = vmax.f32 %v321, %v322
        %v324 = vsub.f32 %v313, %v323
        %v325 = vmul.f32 %v324, 1.442695
        %v326 = vpow.pop %v325
        %v327 = vsel %vm316, %v326, 0.0
        %v328 = vrot.slane %v327, 4
        %v329 = vadd.f32 %v327, %v328
        %v330 = vrot.slane %v329, 2
        %v331 = vadd.f32 %v329, %v330
        %v332 = vrot.slane %v331, 1
        %v333 = vadd.f32 %v331, %v332
        %v334 = vrcp.pop %v333
        %v335 = vmul.f32 %v326, %v334
        %336 = vst [vmem:[%s164] sm:$0x1f] %v335
        %s337 = sand.u32 %s93, 1
        %s338 = scalar_lea.sflag [#allocation3], %s337
        %s339 = sand.u32 %s93, 1
        %s340 = smul.addr %s339, 8
        %s341 = scalar_lea.vmem [#allocation2], %s340
        // Predicated region
        $region33: #{tpu_custom_call.1} parent=31 // pred_check
          %p342 = pneg %p103
        $region34: #{tpu_custom_call.1} parent=31 // pred_check_branch
          %344 = sbr.rel (%p342) target = $region36
        $region35: #{tpu_custom_call.1} parent=31 // pred_region
          %s346 = ssub.s32 128, 128
          %347 = vsyncadd %s338, %s346
          %s348 = smul.addr %s17, 128
          %s349 = scalar_lea.hbm %s3, %s348
          %s351 = sshll.u32 %s341, 4
          %s352 = int_to_ptr.vmem [resolvable:$true] %s351
          %354 = dma.vmem_to_hbm [thread:$0]  %s352, 128, %s349, %s338
        $region36: #{tpu_custom_call.1} parent=31 // pred_fallthru
          _
      $region32: #{tpu_custom_call.1} parent=5 // pred_fallthru
        _
      %p355 = scmp.le.s32.totalorder 2, %s12
      // Predicated region
      $region37: #{tpu_custom_call.1} parent=5 // pred_check
        %p356 = pneg %p355
      $region38: #{tpu_custom_call.1} parent=5 // pred_check_branch
        %358 = sbr.rel (%p356) target = $region40
      $region39: #{tpu_custom_call.1} parent=5 // pred_region
        %s359 = ssub.s32 %s12, 2
        // Predicated region
        $region41: #{tpu_custom_call.1} parent=39 // pred_check
          %p360 = pneg %p109
        $region42: #{tpu_custom_call.1} parent=39 // pred_check_branch
          %362 = sbr.rel (%p360) target = $region44
        $region43: #{tpu_custom_call.1} parent=39 // pred_region
          %s363 = sand.u32 %s94, 1
          %s364 = scalar_lea.sflag [#allocation3], %s363
          %s365 = sand.u32 %s94, 1
          %s366 = smul.addr %s365, 8
          %s367 = scalar_lea.vmem [#allocation2], %s366
          %368 = dma.done %s364, 128
        $region44: #{tpu_custom_call.1} parent=39 // pred_fallthru
          _
      $region40: #{tpu_custom_call.1} parent=5 // pred_fallthru
        _
    $region6: #{tpu_custom_call.1} parent=1 // loop_footer
      %s16 = sadd.s32 1, %s12
    $region7: #{tpu_custom_call.1} parent=1 // loop_footer_branch
      %11 = sbr.rel target = $region3
    $region8: #{tpu_custom_call.1} parent=1 // loop_exit
      _
    %369 = vsyncpa [#allocation3], 1
    %s370 = scalar_lea.sflag [#allocation3], 1
    %371 = vsyncpa %s370, 1

</llo_original>
